<compile_context>
chip_gen: v6e
topology: v6e:2x2x1
jax: 0.10.0
libtpu: 0.0.40
codegen_flags: <defaults>
</compile_context>

<pallas_src>
import jax
import jax.numpy as jnp
from jax import lax
from jax.experimental import pallas as pl
from jax.experimental.pallas import tpu as pltpu
import numpy as np


def _sigmoid_ref(z):
    # Reference-side sigmoid (plain jnp).
    return 1.0 / (1.0 + jnp.exp(-z))


def _sigmoid_kernel(z):
    # In-kernel sigmoid.  The gates are tiny pooled tensors ((Bt,C)/(Bt,HW)),
    # so we keep the exact reciprocal (approx=True would push onto the EUP but
    # costs ~2^-12 relative accuracy for a negligible win here).
    return pl.reciprocal(1.0 + jnp.exp(-z), approx=False)


def _make_conv_masks(H, W):
    """(9, H*W) f32 validity masks for the 3x3 zero-padded conv taps.

    mask[t, p] == 1 iff pixel p shifted by tap t stays inside the HxW image
    (also masks the circular wrap of the in-kernel lane rolls)."""
    HW = H * W
    pid = np.arange(HW)
    prow, pcol = pid // W, pid % W
    masks = np.zeros((9, HW), np.float32)
    for ki in range(3):
        for kj in range(3):
            di, dj = ki - 1, kj - 1
            valid = ((prow + di >= 0) & (prow + di < H)
                     & (pcol + dj >= 0) & (pcol + dj < W))
            masks[ki * 3 + kj] = valid.astype(np.float32)
    return jnp.asarray(masks)


def make_csa_kernel(F, C, Hd, W, HW):
    inv_FHW = 1.0 / (F * HW)
    inv_FC = 1.0 / (F * C)

    def kernel(x_ref, w1t_ref, w2t_ref, mask_ref, wsa_ref, o_ref):
        # x_ref: (Bt, F, C, HW) native dtype; w1t (C, Hd) f32; w2t (Hd, C) f32;
        # mask (9, HW) f32 VMEM; wsa (18,) f32 SMEM scalars.
        x = x_ref[...]                                        # keep native dtype
        w1t = w1t_ref[...]
        w2t = w2t_ref[...]

        # ---- per-timestep pools shared by both attention branches (f32 acc) ----
        sum_F = jnp.sum(x, axis=1, dtype=jnp.float32)         # (Bt, C, HW)
        max_F = jnp.max(x, axis=1).astype(jnp.float32)        # (Bt, C, HW)

        # ---- Channel attention: pooled (Bt, C) stats + tiny shared MLP ----
        ch_avg = jnp.sum(sum_F, axis=2) * inv_FHW             # (Bt, C)
        ch_max = jnp.max(max_F, axis=2)                       # (Bt, C)

        def shared_mlp(v):                                    # (Bt, C) -> (Bt, C), f32
            if C >= 128:
                # MXU-worthy channel counts: two small matmuls on the stacked batch.
                h = jnp.maximum(
                    jnp.dot(v, w1t, preferred_element_type=jnp.float32), 0.0)
                return jnp.dot(h, w2t, preferred_element_type=jnp.float32)
            # Below MXU granularity: VPU broadcast-multiply + XLU reduce.
            h = jnp.maximum(
                jnp.sum(v[:, :, None] * w1t[None, :, :], axis=1), 0.0)   # (Bt, Hd)
            return jnp.sum(h[:, :, None] * w2t[None, :, :], axis=1)      # (Bt, C)

        ca = _sigmoid_kernel(shared_mlp(ch_avg) + shared_mlp(ch_max))    # (Bt, C) in (0,1)
        ca_col = ca[:, :, None]                                          # (Bt, C, 1)

        # ---- Spatial attention (out1 = ca*x never materialized; ca > 0) ----
        s_avg = jnp.sum(sum_F * ca_col, axis=1) * inv_FC      # (Bt, HW)
        s_max = jnp.max(max_F * ca_col, axis=1)               # (Bt, HW)

        # 3x3 zero-padded conv == 9 XLU lane rolls + precomputed validity masks.
        # wsa layout: [0:9] weights for the avg channel, [9:18] for the max channel.
        acc = wsa_ref[4] * s_avg + wsa_ref[13] * s_max        # center tap (offset 0)
        for t in range(9):
            if t == 4:
                continue
            ki, kj = t // 3, t % 3
            off = (ki - 1) * W + (kj - 1)
            r = wsa_ref[t] * s_avg + wsa_ref[9 + t] * s_max   # (Bt, HW)
            r = pltpu.roll(r, shift=(-off) % HW, axis=1)      # r[p] <- r[(p+off) % HW]
            acc = acc + r * mask_ref[pl.ds(t, 1), :]          # zero-pad / wrap mask
        sa = _sigmoid_kernel(acc)                             # (Bt, HW)

        # ---- Fused output: relu(x * (ca ⊗ sa)) — one full-tensor multiply ----
        gate = (ca_col * sa[:, None, :]).astype(x.dtype)      # (Bt, C, HW)
        o_ref[...] = jnp.maximum(x * gate[:, None, :, :], 0.0).astype(o_ref.dtype)

    return kernel


def _choose_batch_tile(B, per_elem_bytes, target_bytes=2 << 20, min_steps=4):
    """Largest divisor Bt of B whose block is <= ~target_bytes while keeping at
    least `min_steps` grid steps (>= 2 per TensorCore on v7x) when B allows.
    Bt = 1 is always legal."""
    best = 1
    for cand in range(2, B + 1):
        if B % cand:
            continue
        if cand * per_elem_bytes > target_bytes:
            continue
        if B // cand < min_steps:
            continue
        best = cand
    return best


def csa_pallas(x, w_ca1, w_ca2, w_sa):
    """x: (B, F, C, H, W); w_ca1: (Hd, C); w_ca2: (C, Hd); w_sa: (1, 2, 3, 3)."""
    B, F, C, H, W = x.shape
    HW = H * W
    Hd = w_ca1.shape[0]

    # NOTE: HW=H*W is a multiple of 128 in typical configs so the (.., C, HW)
    # output block stores are lane-dense.
    # TODO(synk): for H*W not a multiple of 128 (e.g. 14x14), fold C into the
    # output slab's last dim so stores stay unmasked, and reshape back here.
    x_flat = x.reshape(B, F, C, HW)
    w1t = jnp.transpose(w_ca1).astype(jnp.float32)     # (C, Hd)
    w2t = jnp.transpose(w_ca2).astype(jnp.float32)     # (Hd, C)
    wsa_flat = w_sa.reshape(-1).astype(jnp.float32)    # (18,) -> SMEM scalars
    masks = _make_conv_masks(H, W)                     # (9, HW) f32, host-side

    per_elem_bytes = F * C * HW * x.dtype.itemsize
    Bt = _choose_batch_tile(B, per_elem_bytes)

    kernel = make_csa_kernel(F, C, Hd, W, HW)

    out_flat = pl.pallas_call(
        kernel,
        out_shape=jax.ShapeDtypeStruct((B, F, C, HW), x.dtype),
        grid_spec=pltpu.PrefetchScalarGridSpec(
            num_scalar_prefetch=0,
            grid=(B // Bt,),
            in_specs=[
                pl.BlockSpec((Bt, F, C, HW), lambda i: (i, 0, 0, 0)),
                pl.BlockSpec((C, Hd), lambda i: (0, 0)),
                pl.BlockSpec((Hd, C), lambda i: (0, 0)),
                pl.BlockSpec((9, HW), lambda i: (0, 0)),
                pl.BlockSpec(memory_space=pltpu.MemorySpace.SMEM),
            ],
            out_specs=pl.BlockSpec((Bt, F, C, HW), lambda i: (i, 0, 0, 0)),
        ),
        compiler_params=pltpu.CompilerParams(
            dimension_semantics=("parallel",),
            # ~2 MiB blocks double-buffered (in+out) + small f32 intermediates
            # stay well under this; 32 MiB is <= physical VMEM on v5e/v6e/v7x
            # and above v5e's 16 MiB scoped default.
            vmem_limit_bytes=32 * 1024 * 1024),
    )(x_flat, w1t, w2t, masks, wsa_flat)

    return out_flat.reshape(B, F, C, H, W)


def csa_reference(x, w_ca1, w_ca2, w_sa):
    """Pure-JAX reference mirroring the PyTorch module."""
    B, F, C, H, W = x.shape
    # ChannelAttention: pool over (f, h, w) per channel.
    avg = jnp.mean(x, axis=(1, 3, 4))        # (B, C)
    mx = jnp.max(x, axis=(1, 3, 4))          # (B, C)

    def mlp(v):
        h = jnp.maximum(v @ w_ca1.T, 0.0)
        return h @ w_ca2.T

    ca = _sigmoid_ref(mlp(avg) + mlp(mx))    # (B, C)
    out1 = x * ca[:, None, :, None, None]

    # SpatialAttention
    flat = out1.reshape(B, F * C, H, W)
    a = jnp.mean(flat, axis=1, keepdims=True)
    m = jnp.max(flat, axis=1, keepdims=True)
    inp = jnp.concatenate([a, m], axis=1)    # (B, 2, H, W)
    conv = lax.conv_general_dilated(inp, w_sa, (1, 1), 'SAME',
                                    dimension_numbers=('NCHW', 'OIHW', 'NCHW'))
    sa = _sigmoid_ref(conv)[:, :, None, :, :]   # (B, 1, 1, H, W)
    return jnp.maximum(out1 * sa, 0.0)


if __name__ == "__main__":
    key = jax.random.PRNGKey(0)
    k1, k2, k3, k4 = jax.random.split(key, 4)

    B, F, C, H, W = 2, 4, 16, 16, 16   # batch, timeWindows, channels, spatial
    c_ratio = 4
    Hd = C // c_ratio

    x = jax.random.normal(k1, (B, F, C, H, W), jnp.float32)
    w_ca1 = jax.random.normal(k2, (Hd, C), jnp.float32) * 0.3      # Conv3d(C->Hd, 1)
    w_ca2 = jax.random.normal(k3, (C, Hd), jnp.float32) * 0.3      # Conv3d(Hd->C, 1)
    w_sa = jax.random.normal(k4, (1, 2, 3, 3), jnp.float32) * 0.3  # Conv2d(2->1, 3)

    out = csa_pallas(x, w_ca1, w_ca2, w_sa)
    out = jax.block_until_ready(out)

    ref = csa_reference(x, w_ca1, w_ca2, w_sa)
    np.testing.assert_allclose(np.asarray(out), np.asarray(ref), atol=1e-4, rtol=1e-4)

    print("KERNEL_OK")
</pallas_src>

<mosaic_0001>
module attributes {stable_mosaic.version = 11 : i64} {
  func.func @kernel(%arg0: i32, %arg1: memref<1x4x16x256xf32, #tpu.memory_space<vmem>>, %arg2: memref<16x4xf32, #tpu.memory_space<vmem>>, %arg3: memref<4x16xf32, #tpu.memory_space<vmem>>, %arg4: memref<9x256xf32, #tpu.memory_space<vmem>>, %arg5: memref<18xf32, #tpu.memory_space<smem>>, %arg6: memref<1x4x16x256xf32, #tpu.memory_space<vmem>>) attributes {dimension_semantics = [#tpu.dimension_semantics<parallel>], iteration_bounds = array<i64: 2>, scalar_prefetch = 0 : i64, scratch_operands = 0 : i64, tpu.core_type = #tpu.core_type<tc>, window_params = [{transform_indices = @transform_0, window_bounds = array<i64: 1, 4, 16, 256>}, {pipeline_mode = #tpu.pipeline_mode<synchronous>, transform_indices = @transform_1, window_bounds = array<i64: 16, 4>}, {pipeline_mode = #tpu.pipeline_mode<synchronous>, transform_indices = @transform_2, window_bounds = array<i64: 4, 16>}, {pipeline_mode = #tpu.pipeline_mode<synchronous>, transform_indices = @transform_3, window_bounds = array<i64: 9, 256>}, {transform_indices = @transform_4, window_bounds = array<i64: 18>}, {transform_indices = @transform_5, window_bounds = array<i64: 1, 4, 16, 256>}]} {
    %c0 = arith.constant 0 : index
    %c0_0 = arith.constant 0 : index
    %c0_1 = arith.constant 0 : index
    %c0_2 = arith.constant 0 : index
    %0 = vector.load %arg1[%c0, %c0_0, %c0_1, %c0_2] : memref<1x4x16x256xf32, #tpu.memory_space<vmem>>, vector<1x4x16x256xf32>
    %c0_3 = arith.constant 0 : index
    %c0_4 = arith.constant 0 : index
    %1 = vector.load %arg2[%c0_3, %c0_4] : memref<16x4xf32, #tpu.memory_space<vmem>>, vector<16x4xf32>
    %c0_5 = arith.constant 0 : index
    %c0_6 = arith.constant 0 : index
    %2 = vector.load %arg3[%c0_5, %c0_6] : memref<4x16xf32, #tpu.memory_space<vmem>>, vector<4x16xf32>
    %cst = arith.constant dense<0.000000e+00> : vector<1x16x256xf32>
    %3 = vector.multi_reduction <add>, %0, %cst [1] : vector<1x4x16x256xf32> to vector<1x16x256xf32>
    %cst_7 = arith.constant dense<0xFF800000> : vector<1x16x256xf32>
    %4 = vector.multi_reduction <maximumf>, %0, %cst_7 [1] : vector<1x4x16x256xf32> to vector<1x16x256xf32>
    %cst_8 = arith.constant dense<0.000000e+00> : vector<1x16xf32>
    %5 = vector.multi_reduction <add>, %3, %cst_8 [2] : vector<1x16x256xf32> to vector<1x16xf32>
    %cst_9 = arith.constant 9.765625E-4 : f32
    %6 = vector.broadcast %cst_9 : f32 to vector<1x16xf32>
    %7 = arith.mulf %5, %6 : vector<1x16xf32>
    %cst_10 = arith.constant dense<0xFF800000> : vector<1x16xf32>
    %8 = vector.multi_reduction <maximumf>, %4, %cst_10 [2] : vector<1x16x256xf32> to vector<1x16xf32>
    %9 = vector.shape_cast %7 : vector<1x16xf32> to vector<1x16x1xf32>
    %10 = vector.shape_cast %1 : vector<16x4xf32> to vector<1x16x4xf32>
    %11 = vector.broadcast %9 : vector<1x16x1xf32> to vector<1x16x4xf32>
    %12 = arith.mulf %11, %10 : vector<1x16x4xf32>
    %cst_11 = arith.constant dense<0.000000e+00> : vector<1x4xf32>
    %13 = vector.multi_reduction <add>, %12, %cst_11 [1] : vector<1x16x4xf32> to vector<1x4xf32>
    %cst_12 = arith.constant 0.000000e+00 : f32
    %14 = vector.broadcast %cst_12 : f32 to vector<1x4xf32>
    %15 = arith.maximumf %13, %14 : vector<1x4xf32>
    %16 = vector.shape_cast %15 : vector<1x4xf32> to vector<1x4x1xf32>
    %17 = vector.shape_cast %2 : vector<4x16xf32> to vector<1x4x16xf32>
    %18 = vector.broadcast %16 : vector<1x4x1xf32> to vector<1x4x16xf32>
    %19 = arith.mulf %18, %17 : vector<1x4x16xf32>
    %cst_13 = arith.constant dense<0.000000e+00> : vector<1x16xf32>
    %20 = vector.multi_reduction <add>, %19, %cst_13 [1] : vector<1x4x16xf32> to vector<1x16xf32>
    %21 = vector.shape_cast %8 : vector<1x16xf32> to vector<1x16x1xf32>
    %22 = vector.shape_cast %1 : vector<16x4xf32> to vector<1x16x4xf32>
    %23 = vector.broadcast %21 : vector<1x16x1xf32> to vector<1x16x4xf32>
    %24 = arith.mulf %23, %22 : vector<1x16x4xf32>
    %cst_14 = arith.constant dense<0.000000e+00> : vector<1x4xf32>
    %25 = vector.multi_reduction <add>, %24, %cst_14 [1] : vector<1x16x4xf32> to vector<1x4xf32>
    %cst_15 = arith.constant 0.000000e+00 : f32
    %26 = vector.broadcast %cst_15 : f32 to vector<1x4xf32>
    %27 = arith.maximumf %25, %26 : vector<1x4xf32>
    %28 = vector.shape_cast %27 : vector<1x4xf32> to vector<1x4x1xf32>
    %29 = vector.shape_cast %2 : vector<4x16xf32> to vector<1x4x16xf32>
    %30 = vector.broadcast %28 : vector<1x4x1xf32> to vector<1x4x16xf32>
    %31 = arith.mulf %30, %29 : vector<1x4x16xf32>
    %cst_16 = arith.constant dense<0.000000e+00> : vector<1x16xf32>
    %32 = vector.multi_reduction <add>, %31, %cst_16 [1] : vector<1x4x16xf32> to vector<1x16xf32>
    %33 = arith.addf %20, %32 : vector<1x16xf32>
    %cst_17 = arith.constant 0.000000e+00 : f32
    %34 = vector.broadcast %cst_17 : f32 to vector<1x16xf32>
    %35 = arith.subf %34, %33 : vector<1x16xf32>
    %36 = math.exp %35 : vector<1x16xf32>
    %cst_18 = arith.constant 1.000000e+00 : f32
    %37 = vector.broadcast %cst_18 : f32 to vector<1x16xf32>
    %38 = arith.addf %37, %36 : vector<1x16xf32>
    %39 = tpu.reciprocal %38 : vector<1x16xf32> -> vector<1x16xf32>
    %40 = vector.shape_cast %39 : vector<1x16xf32> to vector<1x16x1xf32>
    %41 = vector.broadcast %40 : vector<1x16x1xf32> to vector<1x16x256xf32>
    %42 = arith.mulf %3, %41 : vector<1x16x256xf32>
    %cst_19 = arith.constant dense<0.000000e+00> : vector<1x256xf32>
    %43 = vector.multi_reduction <add>, %42, %cst_19 [1] : vector<1x16x256xf32> to vector<1x256xf32>
    %cst_20 = arith.constant 1.562500e-02 : f32
    %44 = vector.broadcast %cst_20 : f32 to vector<1x256xf32>
    %45 = arith.mulf %43, %44 : vector<1x256xf32>
    %46 = vector.broadcast %40 : vector<1x16x1xf32> to vector<1x16x256xf32>
    %47 = arith.mulf %4, %46 : vector<1x16x256xf32>
    %cst_21 = arith.constant dense<0xFF800000> : vector<1x256xf32>
    %48 = vector.multi_reduction <maximumf>, %47, %cst_21 [1] : vector<1x16x256xf32> to vector<1x256xf32>
    %c4 = arith.constant 4 : index
    %49 = memref.load %arg5[%c4] : memref<18xf32, #tpu.memory_space<smem>>
    %50 = vector.broadcast %49 : f32 to vector<1x256xf32>
    %51 = arith.mulf %50, %45 : vector<1x256xf32>
    %c13 = arith.constant 13 : index
    %52 = memref.load %arg5[%c13] : memref<18xf32, #tpu.memory_space<smem>>
    %53 = vector.broadcast %52 : f32 to vector<1x256xf32>
    %54 = arith.mulf %53, %48 : vector<1x256xf32>
    %55 = arith.addf %51, %54 : vector<1x256xf32>
    %c0_22 = arith.constant 0 : index
    %56 = memref.load %arg5[%c0_22] : memref<18xf32, #tpu.memory_space<smem>>
    %57 = vector.broadcast %56 : f32 to vector<1x256xf32>
    %58 = arith.mulf %57, %45 : vector<1x256xf32>
    %c9 = arith.constant 9 : index
    %59 = memref.load %arg5[%c9] : memref<18xf32, #tpu.memory_space<smem>>
    %60 = vector.broadcast %59 : f32 to vector<1x256xf32>
    %61 = arith.mulf %60, %48 : vector<1x256xf32>
    %62 = arith.addf %58, %61 : vector<1x256xf32>
    %c17_i32 = arith.constant 17 : i32
    %63 = tpu.dynamic_rotate %62 by %c17_i32 dim 1 : vector<1x256xf32>, i32 -> vector<1x256xf32>
    %c0_23 = arith.constant 0 : index
    %c0_24 = arith.constant 0 : index
    %64 = vector.load %arg4[%c0_23, %c0_24] : memref<9x256xf32, #tpu.memory_space<vmem>>, vector<1x256xf32>
    %65 = arith.mulf %63, %64 : vector<1x256xf32>
    %66 = arith.addf %55, %65 : vector<1x256xf32>
    %c1 = arith.constant 1 : index
    %67 = memref.load %arg5[%c1] : memref<18xf32, #tpu.memory_space<smem>>
    %68 = vector.broadcast %67 : f32 to vector<1x256xf32>
    %69 = arith.mulf %68, %45 : vector<1x256xf32>
    %c10 = arith.constant 10 : index
    %70 = memref.load %arg5[%c10] : memref<18xf32, #tpu.memory_space<smem>>
    %71 = vector.broadcast %70 : f32 to vector<1x256xf32>
    %72 = arith.mulf %71, %48 : vector<1x256xf32>
    %73 = arith.addf %69, %72 : vector<1x256xf32>
    %c16_i32 = arith.constant 16 : i32
    %74 = tpu.dynamic_rotate %73 by %c16_i32 dim 1 : vector<1x256xf32>, i32 -> vector<1x256xf32>
    %c1_25 = arith.constant 1 : index
    %c0_26 = arith.constant 0 : index
    %75 = vector.load %arg4[%c1_25, %c0_26] : memref<9x256xf32, #tpu.memory_space<vmem>>, vector<1x256xf32>
    %76 = arith.mulf %74, %75 : vector<1x256xf32>
    %77 = arith.addf %66, %76 : vector<1x256xf32>
    %c2 = arith.constant 2 : index
    %78 = memref.load %arg5[%c2] : memref<18xf32, #tpu.memory_space<smem>>
    %79 = vector.broadcast %78 : f32 to vector<1x256xf32>
    %80 = arith.mulf %79, %45 : vector<1x256xf32>
    %c11 = arith.constant 11 : index
    %81 = memref.load %arg5[%c11] : memref<18xf32, #tpu.memory_space<smem>>
    %82 = vector.broadcast %81 : f32 to vector<1x256xf32>
    %83 = arith.mulf %82, %48 : vector<1x256xf32>
    %84 = arith.addf %80, %83 : vector<1x256xf32>
    %c15_i32 = arith.constant 15 : i32
    %85 = tpu.dynamic_rotate %84 by %c15_i32 dim 1 : vector<1x256xf32>, i32 -> vector<1x256xf32>
    %c2_27 = arith.constant 2 : index
    %c0_28 = arith.constant 0 : index
    %86 = vector.load %arg4[%c2_27, %c0_28] : memref<9x256xf32, #tpu.memory_space<vmem>>, vector<1x256xf32>
    %87 = arith.mulf %85, %86 : vector<1x256xf32>
    %88 = arith.addf %77, %87 : vector<1x256xf32>
    %c3 = arith.constant 3 : index
    %89 = memref.load %arg5[%c3] : memref<18xf32, #tpu.memory_space<smem>>
    %90 = vector.broadcast %89 : f32 to vector<1x256xf32>
    %91 = arith.mulf %90, %45 : vector<1x256xf32>
    %c12 = arith.constant 12 : index
    %92 = memref.load %arg5[%c12] : memref<18xf32, #tpu.memory_space<smem>>
    %93 = vector.broadcast %92 : f32 to vector<1x256xf32>
    %94 = arith.mulf %93, %48 : vector<1x256xf32>
    %95 = arith.addf %91, %94 : vector<1x256xf32>
    %c1_i32 = arith.constant 1 : i32
    %96 = tpu.dynamic_rotate %95 by %c1_i32 dim 1 : vector<1x256xf32>, i32 -> vector<1x256xf32>
    %c3_29 = arith.constant 3 : index
    %c0_30 = arith.constant 0 : index
    %97 = vector.load %arg4[%c3_29, %c0_30] : memref<9x256xf32, #tpu.memory_space<vmem>>, vector<1x256xf32>
    %98 = arith.mulf %96, %97 : vector<1x256xf32>
    %99 = arith.addf %88, %98 : vector<1x256xf32>
    %c5 = arith.constant 5 : index
    %100 = memref.load %arg5[%c5] : memref<18xf32, #tpu.memory_space<smem>>
    %101 = vector.broadcast %100 : f32 to vector<1x256xf32>
    %102 = arith.mulf %101, %45 : vector<1x256xf32>
    %c14 = arith.constant 14 : index
    %103 = memref.load %arg5[%c14] : memref<18xf32, #tpu.memory_space<smem>>
    %104 = vector.broadcast %103 : f32 to vector<1x256xf32>
    %105 = arith.mulf %104, %48 : vector<1x256xf32>
    %106 = arith.addf %102, %105 : vector<1x256xf32>
    %c255_i32 = arith.constant 255 : i32
    %107 = tpu.dynamic_rotate %106 by %c255_i32 dim 1 : vector<1x256xf32>, i32 -> vector<1x256xf32>
    %c5_31 = arith.constant 5 : index
    %c0_32 = arith.constant 0 : index
    %108 = vector.load %arg4[%c5_31, %c0_32] : memref<9x256xf32, #tpu.memory_space<vmem>>, vector<1x256xf32>
    %109 = arith.mulf %107, %108 : vector<1x256xf32>
    %110 = arith.addf %99, %109 : vector<1x256xf32>
    %c6 = arith.constant 6 : index
    %111 = memref.load %arg5[%c6] : memref<18xf32, #tpu.memory_space<smem>>
    %112 = vector.broadcast %111 : f32 to vector<1x256xf32>
    %113 = arith.mulf %112, %45 : vector<1x256xf32>
    %c15 = arith.constant 15 : index
    %114 = memref.load %arg5[%c15] : memref<18xf32, #tpu.memory_space<smem>>
    %115 = vector.broadcast %114 : f32 to vector<1x256xf32>
    %116 = arith.mulf %115, %48 : vector<1x256xf32>
    %117 = arith.addf %113, %116 : vector<1x256xf32>
    %c241_i32 = arith.constant 241 : i32
    %118 = tpu.dynamic_rotate %117 by %c241_i32 dim 1 : vector<1x256xf32>, i32 -> vector<1x256xf32>
    %c6_33 = arith.constant 6 : index
    %c0_34 = arith.constant 0 : index
    %119 = vector.load %arg4[%c6_33, %c0_34] : memref<9x256xf32, #tpu.memory_space<vmem>>, vector<1x256xf32>
    %120 = arith.mulf %118, %119 : vector<1x256xf32>
    %121 = arith.addf %110, %120 : vector<1x256xf32>
    %c7 = arith.constant 7 : index
    %122 = memref.load %arg5[%c7] : memref<18xf32, #tpu.memory_space<smem>>
    %123 = vector.broadcast %122 : f32 to vector<1x256xf32>
    %124 = arith.mulf %123, %45 : vector<1x256xf32>
    %c16 = arith.constant 16 : index
    %125 = memref.load %arg5[%c16] : memref<18xf32, #tpu.memory_space<smem>>
    %126 = vector.broadcast %125 : f32 to vector<1x256xf32>
    %127 = arith.mulf %126, %48 : vector<1x256xf32>
    %128 = arith.addf %124, %127 : vector<1x256xf32>
    %c240_i32 = arith.constant 240 : i32
    %129 = tpu.dynamic_rotate %128 by %c240_i32 dim 1 : vector<1x256xf32>, i32 -> vector<1x256xf32>
    %c7_35 = arith.constant 7 : index
    %c0_36 = arith.constant 0 : index
    %130 = vector.load %arg4[%c7_35, %c0_36] : memref<9x256xf32, #tpu.memory_space<vmem>>, vector<1x256xf32>
    %131 = arith.mulf %129, %130 : vector<1x256xf32>
    %132 = arith.addf %121, %131 : vector<1x256xf32>
    %c8 = arith.constant 8 : index
    %133 = memref.load %arg5[%c8] : memref<18xf32, #tpu.memory_space<smem>>
    %134 = vector.broadcast %133 : f32 to vector<1x256xf32>
    %135 = arith.mulf %134, %45 : vector<1x256xf32>
    %c17 = arith.constant 17 : index
    %136 = memref.load %arg5[%c17] : memref<18xf32, #tpu.memory_space<smem>>
    %137 = vector.broadcast %136 : f32 to vector<1x256xf32>
    %138 = arith.mulf %137, %48 : vector<1x256xf32>
    %139 = arith.addf %135, %138 : vector<1x256xf32>
    %c239_i32 = arith.constant 239 : i32
    %140 = tpu.dynamic_rotate %139 by %c239_i32 dim 1 : vector<1x256xf32>, i32 -> vector<1x256xf32>
    %c8_37 = arith.constant 8 : index
    %c0_38 = arith.constant 0 : index
    %141 = vector.load %arg4[%c8_37, %c0_38] : memref<9x256xf32, #tpu.memory_space<vmem>>, vector<1x256xf32>
    %142 = arith.mulf %140, %141 : vector<1x256xf32>
    %143 = arith.addf %132, %142 : vector<1x256xf32>
    %cst_39 = arith.constant 0.000000e+00 : f32
    %144 = vector.broadcast %cst_39 : f32 to vector<1x256xf32>
    %145 = arith.subf %144, %143 : vector<1x256xf32>
    %146 = math.exp %145 : vector<1x256xf32>
    %cst_40 = arith.constant 1.000000e+00 : f32
    %147 = vector.broadcast %cst_40 : f32 to vector<1x256xf32>
    %148 = arith.addf %147, %146 : vector<1x256xf32>
    %149 = tpu.reciprocal %148 : vector<1x256xf32> -> vector<1x256xf32>
    %150 = vector.shape_cast %149 : vector<1x256xf32> to vector<1x1x256xf32>
    %151 = vector.broadcast %40 : vector<1x16x1xf32> to vector<1x16x256xf32>
    %152 = vector.broadcast %150 : vector<1x1x256xf32> to vector<1x16x256xf32>
    %153 = arith.mulf %151, %152 : vector<1x16x256xf32>
    %154 = vector.shape_cast %153 : vector<1x16x256xf32> to vector<1x1x16x256xf32>
    %155 = vector.broadcast %154 : vector<1x1x16x256xf32> to vector<1x4x16x256xf32>
    %156 = arith.mulf %0, %155 : vector<1x4x16x256xf32>
    %cst_41 = arith.constant 0.000000e+00 : f32
    %157 = vector.broadcast %cst_41 : f32 to vector<1x4x16x256xf32>
    %158 = arith.maximumf %156, %157 : vector<1x4x16x256xf32>
    %c0_42 = arith.constant 0 : index
    %c0_43 = arith.constant 0 : index
    %c0_44 = arith.constant 0 : index
    %c0_45 = arith.constant 0 : index
    %159 = vector.load %arg6[%c0_42, %c0_43, %c0_44, %c0_45] : memref<1x4x16x256xf32, #tpu.memory_space<vmem>>, vector<1x4x16x256xf32>
    tpu.vector_store %arg6[%c0_42, %c0_43, %c0_44, %c0_45], %158 {strides = array<i32>} : memref<1x4x16x256xf32, #tpu.memory_space<vmem>>, vector<1x4x16x256xf32>,
    return
  }
  func.func @transform_0(%arg0: i32) -> (i32, i32, i32, i32) {
    %c0_i32 = arith.constant 0 : i32
    %c0_i32_0 = arith.constant 0 : i32
    %c0_i32_1 = arith.constant 0 : i32
    %c0_i32_2 = arith.constant 0 : i32
    return %arg0, %c0_i32, %c0_i32_0, %c0_i32_1 : i32, i32, i32, i32
  }
  func.func @transform_1(%arg0: i32) -> (i32, i32) {
    %c0_i32 = arith.constant 0 : i32
    %c0_i32_0 = arith.constant 0 : i32
    %c0_i32_1 = arith.constant 0 : i32
    return %c0_i32, %c0_i32_0 : i32, i32
  }
  func.func @transform_2(%arg0: i32) -> (i32, i32) {
    %c0_i32 = arith.constant 0 : i32
    %c0_i32_0 = arith.constant 0 : i32
    %c0_i32_1 = arith.constant 0 : i32
    return %c0_i32, %c0_i32_0 : i32, i32
  }
  func.func @transform_3(%arg0: i32) -> (i32, i32) {
    %c0_i32 = arith.constant 0 : i32
    %c0_i32_0 = arith.constant 0 : i32
    %c0_i32_1 = arith.constant 0 : i32
    return %c0_i32, %c0_i32_0 : i32, i32
  }
  func.func @transform_4(%arg0: i32) -> i32 {
    %c0_i32 = arith.constant 0 : i32
    %c0_i32_0 = arith.constant 0 : i32
    return %c0_i32 : i32
  }
  func.func @transform_5(%arg0: i32) -> (i32, i32, i32, i32) {
    %c0_i32 = arith.constant 0 : i32
    %c0_i32_0 = arith.constant 0 : i32
    %c0_i32_1 = arith.constant 0 : i32
    %c0_i32_2 = arith.constant 0 : i32
    return %arg0, %c0_i32, %c0_i32_0, %c0_i32_1 : i32, i32, i32, i32
  }
}

</mosaic_0001>

<llo_original>
// kernel: tpu_custom_call.1
$region0: #{tpu_custom_call.1}
  #allocation0 [shape = 'u32[]', space=smem, size = 0x4, offset = 0x4, fixed_abs, tag = 'smem constant byte address 0x4 - core index']
  #allocation1 [shape = 'u32[144,128]{1,0:T(1,128)}', space=vmem, size = 0x12000, scoped, tag = 'internal scratch']
  %s0 = inlined_call_operand.hbm [shape: f32[2,4,16,256], index: 0, kind: input, shape index: {}]
  %s1 = inlined_call_operand.vmem [shape: f32[16,4], index: 1, kind: input, shape index: {}]
  %s2 = inlined_call_operand.vmem [shape: f32[4,16], index: 2, kind: input, shape index: {}]
  %s3 = inlined_call_operand.hbm [shape: f32[9,256], index: 3, kind: input, shape index: {}]
  %s4 = inlined_call_operand.vmem [shape: f32[18], index: 4, kind: input, shape index: {}]
  %s5 = inlined_call_operand.hbm [shape: f32[2,4,16,256], index: 5, kind: output, shape index: {}]
  %s6 = sld [smem:[#allocation0]]
  $region65: #{tpu_custom_call.1} parent=0
    _
  %s8 = ssub.s32 1, %s6
  %s9 = scalar_select 0, %s8, %s6
  $region1: #{tpu_custom_call.1} parent=0
    #allocation2 [shape = 'u8[131072]{0}', space=vmem, size = 0x20000, scoped, tag = 'input window, operand 0']
    #allocation3 [shape = 's32[2]{0}', space=sflag, size = 0x8, scoped, tag = 'scoped memory for tpu_custom_call.1']
    #allocation4 [shape = 's32[2]{0}', space=sflag, size = 0x8, scoped, tag = 'scoped memory for tpu_custom_call.1']
    #allocation5 [shape = 's32[2]{0}', space=sflag, size = 0x8, scoped, tag = 'scoped memory for tpu_custom_call.1']
    #allocation6 [shape = 'u8[16384]{0}', space=vmem, size = 0x4000, scoped, tag = 'input window, operand 3, single buffered']
    #allocation7 [shape = 's32[1]{0}', space=sflag, size = 0x4, scoped, tag = 'scoped memory for tpu_custom_call.1']
    #allocation8 [shape = 'u8[512]{0}', space=smem, size = 0x200, scoped, tag = 'input window, operand 4, single buffered']
    #allocation9 [shape = 'u8[131072]{0}', space=vmem, size = 0x20000, scoped, tag = 'output window, operand 0']
    %10 = vsyncpa [#allocation3], 0
    %s11 = scalar_lea.sflag [#allocation3], 1
    %12 = vsyncpa %s11, 0
    %13 = vsyncpa [#allocation7], 0
    %14 = vsyncpa [#allocation5], 0
    %15 = vsyncpa [#allocation4], 0
    %s16 = scalar_lea.sflag [#allocation4], 1
    %17 = vsyncpa %s16, 0
    loop: start=0, step=1, limit=4
    $region2: #{tpu_custom_call.1} parent=1 // loop_pre_header
      _
    $region3: #{tpu_custom_call.1} parent=1 // loop_header
      %s19 = sphi 0, %s23
      %p20 = scmp.ge.s32.totalorder %s19, 4
      %s29 = sphi 0, %s31
      %s32 = sphi 0, %s29
      %s33 = sphi 0, %s32
      %s49 = sphi 0, %s33
      %s53 = sphi 0, %s53
      %s55 = sphi 0, %s53
      %s56 = sphi 0, %s55
      %s70 = sphi 0, %s56
      %s74 = sphi 0, %s74
      %s76 = sphi 0, %s74
      %s77 = sphi 0, %s76
      %s91 = sphi 0, %s77
      %s95 = sphi 0, %s95
      %s97 = sphi 0, %s95
      %s98 = sphi 0, %s97
      %s112 = sphi 0, %s98
      %s116 = sphi 0, %s116
      %s118 = sphi 0, %s116
      %s119 = sphi 0, %s118
      %s133 = sphi 0, %s119
      %s139 = sphi 0, %s141
      %s142 = sphi 0, %s139
      %s143 = sphi 0, %s142
      %s159 = sphi 0, %s143
    $region4: #{tpu_custom_call.1} parent=1 // loop_header_branch
      %22 = sbr.rel (%p20) target = $region8
    $region5: #{tpu_custom_call.1} parent=1 // loop_body
      %s24 = ssub.s32 %s19, 1
      %s25 = ssub.s32 %s19, 2
      %s26 = sadd.s32 %s19, 1
      %s27 = ssub.s32 %s19, %s26
      %p28 = scmp.eq.s32.totalorder %s27, 0
      %s30 = sadd.s32 %s29, 1
      %s31 = scalar_select %p28, %s29, %s30
      %p34 = pneg %p28
      %p35 = scmp.eq.s32.totalorder %s19, 1
      %p36 = por %p34, %p35
      %p37 = scmp.ne.s32.totalorder %s29, %s32
      %p38 = scmp.eq.s32.totalorder %s19, 0
      %p39 = por %p37, %p38
      %p40 = scmp.ne.s32.totalorder %s29, %s32
      %p41 = scmp.eq.s32.totalorder %s24, 1
      %p42 = por %p40, %p41
      %p43 = scmp.ne.s32.totalorder %s32, %s33
      %p44 = scmp.eq.s32.totalorder %s24, 0
      %p45 = por %p43, %p44
      %p46 = scmp.ne.s32.totalorder %s32, %s33
      %p47 = scmp.eq.s32.totalorder %s25, 1
      %p48 = por %p46, %p47
      %p50 = scmp.ne.s32.totalorder %s33, %s49
      %p51 = scmp.eq.s32.totalorder %s25, 0
      %p52 = por %p50, %p51
      %s54 = sadd.s32 %s53, 1
      %p57 = scmp.eq.s32.totalorder %s19, 1
      %p58 = scmp.ne.s32.totalorder %s53, %s55
      %p59 = scmp.eq.s32.totalorder %s19, 0
      %p60 = por %p58, %p59
      %p61 = scmp.ne.s32.totalorder %s53, %s55
      %p62 = scmp.eq.s32.totalorder %s24, 1
      %p63 = por %p61, %p62
      %p64 = scmp.ne.s32.totalorder %s55, %s56
      %p65 = scmp.eq.s32.totalorder %s24, 0
      %p66 = por %p64, %p65
      %p67 = scmp.ne.s32.totalorder %s55, %s56
      %p68 = scmp.eq.s32.totalorder %s25, 1
      %p69 = por %p67, %p68
      %p71 = scmp.ne.s32.totalorder %s56, %s70
      %p72 = scmp.eq.s32.totalorder %s25, 0
      %p73 = por %p71, %p72
      %s75 = sadd.s32 %s74, 1
      %p78 = scmp.eq.s32.totalorder %s19, 1
      %p79 = scmp.ne.s32.totalorder %s74, %s76
      %p80 = scmp.eq.s32.totalorder %s19, 0
      %p81 = por %p79, %p80
      %p82 = scmp.ne.s32.totalorder %s74, %s76
      %p83 = scmp.eq.s32.totalorder %s24, 1
      %p84 = por %p82, %p83
      %p85 = scmp.ne.s32.totalorder %s76, %s77
      %p86 = scmp.eq.s32.totalorder %s24, 0
      %p87 = por %p85, %p86
      %p88 = scmp.ne.s32.totalorder %s76, %s77
      %p89 = scmp.eq.s32.totalorder %s25, 1
      %p90 = por %p88, %p89
      %p92 = scmp.ne.s32.totalorder %s77, %s91
      %p93 = scmp.eq.s32.totalorder %s25, 0
      %p94 = por %p92, %p93
      %s96 = sadd.s32 %s95, 1
      %p99 = scmp.eq.s32.totalorder %s19, 1
      %p100 = scmp.ne.s32.totalorder %s95, %s97
      %p101 = scmp.eq.s32.totalorder %s19, 0
      %p102 = por %p100, %p101
      %p103 = scmp.ne.s32.totalorder %s95, %s97
      %p104 = scmp.eq.s32.totalorder %s24, 1
      %p105 = por %p103, %p104
      %p106 = scmp.ne.s32.totalorder %s97, %s98
      %p107 = scmp.eq.s32.totalorder %s24, 0
      %p108 = por %p106, %p107
      %p109 = scmp.ne.s32.totalorder %s97, %s98
      %p110 = scmp.eq.s32.totalorder %s25, 1
      %p111 = por %p109, %p110
      %p113 = scmp.ne.s32.totalorder %s98, %s112
      %p114 = scmp.eq.s32.totalorder %s25, 0
      %p115 = por %p113, %p114
      %s117 = sadd.s32 %s116, 1
      %p120 = scmp.eq.s32.totalorder %s19, 1
      %p121 = scmp.ne.s32.totalorder %s116, %s118
      %p122 = scmp.eq.s32.totalorder %s19, 0
      %p123 = por %p121, %p122
      %p124 = scmp.ne.s32.totalorder %s116, %s118
      %p125 = scmp.eq.s32.totalorder %s24, 1
      %p126 = por %p124, %p125
      %p127 = scmp.ne.s32.totalorder %s118, %s119
      %p128 = scmp.eq.s32.totalorder %s24, 0
      %p129 = por %p127, %p128
      %p130 = scmp.ne.s32.totalorder %s118, %s119
      %p131 = scmp.eq.s32.totalorder %s25, 1
      %p132 = por %p130, %p131
      %p134 = scmp.ne.s32.totalorder %s119, %s133
      %p135 = scmp.eq.s32.totalorder %s25, 0
      %p136 = por %p134, %p135
      %s137 = ssub.s32 %s19, %s26
      %p138 = scmp.eq.s32.totalorder %s137, 0
      %s140 = sadd.s32 %s139, 1
      %s141 = scalar_select %p138, %s139, %s140
      %p144 = pneg %p138
      %p145 = scmp.eq.s32.totalorder %s19, 1
      %p146 = por %p144, %p145
      %p147 = scmp.ne.s32.totalorder %s139, %s142
      %p148 = scmp.eq.s32.totalorder %s19, 0
      %p149 = por %p147, %p148
      %p150 = scmp.ne.s32.totalorder %s139, %s142
      %p151 = scmp.eq.s32.totalorder %s24, 1
      %p152 = por %p150, %p151
      %p153 = scmp.ne.s32.totalorder %s142, %s143
      %p154 = scmp.eq.s32.totalorder %s24, 0
      %p155 = por %p153, %p154
      %p156 = scmp.ne.s32.totalorder %s142, %s143
      %p157 = scmp.eq.s32.totalorder %s25, 1
      %p158 = por %p156, %p157
      %p160 = scmp.ne.s32.totalorder %s143, %s159
      %p161 = scmp.eq.s32.totalorder %s25, 0
      %p162 = por %p160, %p161
      %p163 = scmp.le.s32.totalorder 1, %s19
      %p164 = scmp.lt.s32.totalorder %s19, 3
      %p165 = pnand %p163, %p164
      %p166 = pneg %p165
      // Predicated region
      $region9: #{tpu_custom_call.1} parent=5 // pred_check
        _
      $region10: #{tpu_custom_call.1} parent=5 // pred_check_branch
        %168 = sbr.rel (%p165) target = $region12
      $region11: #{tpu_custom_call.1} parent=5 // pred_region
        %s169 = ssub.s32 %s19, 1
        // Predicated region
        $region13: #{tpu_custom_call.1} parent=11 // pred_check
          %p170 = pneg %p66
        $region14: #{tpu_custom_call.1} parent=11 // pred_check_branch
          %172 = sbr.rel (%p170) target = $region16
        $region15: #{tpu_custom_call.1} parent=11 // pred_region
          _
        $region16: #{tpu_custom_call.1} parent=11 // pred_fallthru
          _
        // Predicated region
        $region17: #{tpu_custom_call.1} parent=11 // pred_check
          %p173 = pneg %p87
        $region18: #{tpu_custom_call.1} parent=11 // pred_check_branch
          %175 = sbr.rel (%p173) target = $region20
        $region19: #{tpu_custom_call.1} parent=11 // pred_region
          _
        $region20: #{tpu_custom_call.1} parent=11 // pred_fallthru
          _
        // Predicated region
        $region21: #{tpu_custom_call.1} parent=11 // pred_check
          %p176 = pneg %p108
        $region22: #{tpu_custom_call.1} parent=11 // pred_check_branch
          %178 = sbr.rel (%p176) target = $region24
        $region23: #{tpu_custom_call.1} parent=11 // pred_region
          %s180 = ssub.s32 512, 512
          %181 = vsyncadd [#allocation7], %s180
          %s182 = sshll.u32 [#allocation6], 4
          %s183 = int_to_ptr.vmem [resolvable:$true] %s182
          %188 = dma.hbm_to_vmem [thread:$0]  %s3, 512, %s183, [#allocation7], 256, 256, 16
        $region24: #{tpu_custom_call.1} parent=11 // pred_fallthru
          _
        // Predicated region
        $region25: #{tpu_custom_call.1} parent=11 // pred_check
          %p189 = pneg %p129
        $region26: #{tpu_custom_call.1} parent=11 // pred_check_branch
          %191 = sbr.rel (%p189) target = $region28
        $region27: #{tpu_custom_call.1} parent=11 // pred_region
          %s193 = ssub.s32 16, 16
          %194 = vsyncadd [#allocation5], %s193
          %s196 = sshll.u32 %s4, 4
          %s197 = int_to_ptr.vmem [resolvable:$true] %s196
          %199 = dma.vmem_to_smem %s197, 16, [#allocation8], [#allocation5]
        $region28: #{tpu_custom_call.1} parent=11 // pred_fallthru
          _
      $region12: #{tpu_custom_call.1} parent=5 // pred_fallthru
        _
      %p200 = scmp.lt.s32.totalorder %s19, 2
      // Predicated region
      $region29: #{tpu_custom_call.1} parent=5 // pred_check
        %p201 = pneg %p200
      $region30: #{tpu_custom_call.1} parent=5 // pred_check_branch
        %203 = sbr.rel (%p201) target = $region32
      $region31: #{tpu_custom_call.1} parent=5 // pred_region
        // Predicated region
        $region33: #{tpu_custom_call.1} parent=31 // pred_check
          %p204 = pneg %p39
        $region34: #{tpu_custom_call.1} parent=31 // pred_check_branch
          %206 = sbr.rel (%p204) target = $region36
        $region35: #{tpu_custom_call.1} parent=31 // pred_region
          %s207 = sand.u32 %s29, 1
          %s208 = scalar_lea.sflag [#allocation3], %s207
          %s209 = sand.u32 %s29, 1
          %s210 = smul.addr %s209, 128
          %s211 = scalar_lea.vmem [#allocation2], %s210
          %s213 = ssub.s32 2048, 2048
          %214 = vsyncadd %s208, %s213
          %s215 = smul.addr %s19, 16
          %s216 = smul.addr %s215, 128
          %s217 = scalar_lea.hbm %s0, %s216
          %s218 = sshll.u32 %s211, 4
          %s219 = int_to_ptr.vmem [resolvable:$true] %s218
          %224 = dma.hbm_to_vmem [thread:$0]  %s217, 2048, %s219, %s208, 256, 256, 16
        $region36: #{tpu_custom_call.1} parent=31 // pred_fallthru
          _
      $region32: #{tpu_custom_call.1} parent=5 // pred_fallthru
        _
      %p225 = scmp.le.s32.totalorder 1, %s19
      %p226 = scmp.lt.s32.totalorder %s19, 3
      %p227 = pnand %p225, %p226
      %p228 = pneg %p227
      // Predicated region
      $region37: #{tpu_custom_call.1} parent=5 // pred_check
        _
      $region38: #{tpu_custom_call.1} parent=5 // pred_check_branch
        %230 = sbr.rel (%p227) target = $region40
      $region39: #{tpu_custom_call.1} parent=5 // pred_region
        %s231 = ssub.s32 %s19, 1
        %s232 = sand.u32 %s32, 1
        %s233 = scalar_lea.sflag [#allocation3], %s232
        %s234 = sand.u32 %s32, 1
        %s235 = smul.addr %s234, 128
        %s236 = scalar_lea.vmem [#allocation2], %s235
        // Predicated region
        $region41: #{tpu_custom_call.1} parent=39 // pred_check
          %p237 = pneg %p45
        $region42: #{tpu_custom_call.1} parent=39 // pred_check_branch
          %239 = sbr.rel (%p237) target = $region44
        $region43: #{tpu_custom_call.1} parent=39 // pred_region
          %240 = dma.done %s233, 2048
        $region44: #{tpu_custom_call.1} parent=39 // pred_fallthru
          _
        // Predicated region
        $region45: #{tpu_custom_call.1} parent=39 // pred_check
          %p241 = pneg %p108
        $region46: #{tpu_custom_call.1} parent=39 // pred_check_branch
          %243 = sbr.rel (%p241) target = $region48
        $region47: #{tpu_custom_call.1} parent=39 // pred_region
          %244 = dma.done [#allocation7], 512
        $region48: #{tpu_custom_call.1} parent=39 // pred_fallthru
          _
        // Predicated region
        $region49: #{tpu_custom_call.1} parent=39 // pred_check
          %p245 = pneg %p129
        $region50: #{tpu_custom_call.1} parent=39 // pred_check_branch
          %247 = sbr.rel (%p245) target = $region52
        $region51: #{tpu_custom_call.1} parent=39 // pred_region
          %248 = dma.done [#allocation5], 16
        $region52: #{tpu_custom_call.1} parent=39 // pred_fallthru
          _
        %249 = sfence
        %s250 = sand.u32 %s32, 1
        %s251 = scalar_lea.sflag [#allocation3], %s250
        %s252 = sand.u32 %s32, 1
        %s253 = smul.addr %s252, 128
        %s254 = scalar_lea.vmem [#allocation2], %s253
        %p255 = pneg %p45
        %p256 = pneg %p42
        %p257 = pneg %p66
        %p258 = pneg %p63
        %p259 = pneg %p87
        %p260 = pneg %p84
        %p261 = pneg %p108
        %p262 = pneg %p105
        %p263 = pneg %p129
        %p264 = pneg %p126
        %p265 = pneg %p155
        %p266 = pneg %p152
        %s267 = sand.u32 %s142, 1
        %s268 = scalar_lea.sflag [#allocation4], %s267
        %s269 = sand.u32 %s142, 1
        %s270 = smul.addr %s269, 128
        %s271 = scalar_lea.vmem [#allocation9], %s270
        %v272 = vld [vmem:[%s236] sm:$0xff]
        %v273 = vld [vmem:[%s236 + $0x8] sm:$0xff]
        %v274 = vld [vmem:[%s236 + $0x10] sm:$0xff]
        %v275 = vld [vmem:[%s236 + $0x18] sm:$0xff]
        %v276 = vld [vmem:[%s236 + $0x20] sm:$0xff]
        %v277 = vld [vmem:[%s236 + $0x28] sm:$0xff]
        %v278 = vld [vmem:[%s236 + $0x30] sm:$0xff]
        %v279 = vld [vmem:[%s236 + $0x38] sm:$0xff]
        %v280 = vld [vmem:[%s236 + $0x40] sm:$0xff]
        %v281 = vld [vmem:[%s236 + $0x48] sm:$0xff]
        %v282 = vld [vmem:[%s236 + $0x50] sm:$0xff]
        %v283 = vld [vmem:[%s236 + $0x58] sm:$0xff]
        %v284 = vld [vmem:[%s236 + $0x60] sm:$0xff]
        %v285 = vld [vmem:[%s236 + $0x68] sm:$0xff]
        %v286 = vld [vmem:[%s236 + $0x70] sm:$0xff]
        %v287 = vld [vmem:[%s236 + $0x78] sm:$0xff]
        %v288 = vld [vmem:[%s1] sm:$0xff]
        %v289 = vld [vmem:[%s1 + $0x8] sm:$0xff]
        %v290 = vld [vmem:[%s2] sm:$0xf]
        %v291 = vadd.f32 %v272, %v276
        %v292 = vadd.f32 %v291, %v280
        %v293 = vadd.f32 %v292, %v284
        %v294 = vadd.f32 %v273, %v277
        %v295 = vadd.f32 %v294, %v281
        %v296 = vadd.f32 %v295, %v285
        %v297 = vadd.f32 %v274, %v278
        %v298 = vadd.f32 %v297, %v282
        %v299 = vadd.f32 %v298, %v286
        %v300 = vadd.f32 %v275, %v279
        %v301 = vadd.f32 %v300, %v283
        %v302 = vadd.f32 %v301, %v287
        %v303 = vmax.f32 %v272, %v276
        %v304 = vmax.f32 %v303, %v280
        %v305 = vmax.f32 %v304, %v284
        %v306 = vmax.f32 %v273, %v277
        %v307 = vmax.f32 %v306, %v281
        %v308 = vmax.f32 %v307, %v285
        %v309 = vmax.f32 %v274, %v278
        %v310 = vmax.f32 %v309, %v282
        %v311 = vmax.f32 %v310, %v286
        %v312 = vmax.f32 %v275, %v279
        %v313 = vmax.f32 %v312, %v283
        %v314 = vmax.f32 %v313, %v287
        %v315 = vadd.f32 %v293, %v296
        %316 = vadd.xlane.f32.xlu0 %v315
        %v317 = vpop.xlane.xlu0 %316
        %v318 = vadd.f32 %v299, %v302
        %319 = vadd.xlane.f32.xlu0 %v318
        %v320 = vpop.xlane.xlu0 %319
        %v321 = vmul.f32 %v317, 0.0009765625
        %v322 = vmul.f32 %v320, 0.0009765625
        %v323 = vmax.f32 %v305, %v308
        %324 = vmax.xlane.f32.xlu0 %v323
        %v325 = vpop.xlane.xlu0 %324
        %v326 = vmax.f32 %v311, %v314
        %327 = vmax.xlane.f32.xlu0 %v326
        %v328 = vpop.xlane.xlu0 %327
        %v329 = vmul.f32 %v321, %v288
        %v330 = vmul.f32 %v322, %v289
        %vm331 = vcmask 31744
        %v332 = vsel %vm331, %v329, 0.0
        %v333 = vsel %vm331, %v330, 0.0
        %v334 = vadd.f32 %v332, %v333
        %v335 = vrot.slane %v334, 4
        %v336 = vadd.f32 %v334, %v335
        %v337 = vrot.slane %v336, 2
        %v338 = vadd.f32 %v336, %v337
        %v339 = vrot.slane %v338, 1
        %v340 = vadd.f32 %v338, %v339
        %v341 = vmax.f32 %v340, 0.0
        %343 = vbcast.lane.b32.xlu0 %v341, 256
        %v344 = vpop.permute.xlu0 %343
        %v345 = vmul.f32 %v344, %v290
        %vm346 = vcmask 125952
        %v347 = vsel %vm346, %v345, 0.0
        %v348 = vrot.slane %v347, 4
        %v349 = vadd.f32 %v347, %v348
        %v350 = vrot.slane %v349, 2
        %v351 = vadd.f32 %v349, %v350
        %v352 = vrot.slane %v351, 1
        %v353 = vadd.f32 %v351, %v352
        %v354 = vmul.f32 %v325, %v288
        %v355 = vmul.f32 %v328, %v289
        %v356 = vsel %vm331, %v354, 0.0
        %v357 = vsel %vm331, %v355, 0.0
        %v358 = vadd.f32 %v356, %v357
        %v359 = vrot.slane %v358, 4
        %v360 = vadd.f32 %v358, %v359
        %v361 = vrot.slane %v360, 2
        %v362 = vadd.f32 %v360, %v361
        %v363 = vrot.slane %v362, 1
        %v364 = vadd.f32 %v362, %v363
        %v365 = vmax.f32 %v364, 0.0
        %367 = vbcast.lane.b32.xlu0 %v365, 256
        %v368 = vpop.permute.xlu0 %367
        %v369 = vmul.f32 %v368, %v290
        %v370 = vsel %vm346, %v369, 0.0
        %v371 = vrot.slane %v370, 4
        %v372 = vadd.f32 %v370, %v371
        %v373 = vrot.slane %v372, 2
        %v374 = vadd.f32 %v372, %v373
        %v375 = vrot.slane %v374, 1
        %v376 = vadd.f32 %v374, %v375
        %v377 = vadd.f32 %v353, %v376
        %v378 = vsub.f32 0.0, %v377
        %v379 = vmul.f32 %v378, 1.442695
        %v380 = vpow.pop %v379
        %v381 = vadd.f32 %v380, 1.0
        %v382 = vrcp.pop %v381
        %384 = vbcast.lane.b32.xlu0 %v382, 256
        %v385 = vpop.permute.xlu0 %384
        %s387 = sor.u32 256, 8
        %388 = vbcast.lane.b32.xlu0 %v382, %s387
        %v389 = vpop.permute.xlu0 %388
        %v390 = vmul.f32 %v293, %v385
        %v391 = vmul.f32 %v296, %v385
        %v392 = vmul.f32 %v299, %v389
        %v393 = vmul.f32 %v302, %v389
        %v394 = vadd.f32 %v390, %v392
        %v395 = vrot.slane %v394, 4
        %v396 = vadd.f32 %v394, %v395
        %v397 = vrot.slane %v396, 2
        %v398 = vadd.f32 %v396, %v397
        %v399 = vrot.slane %v398, 1
        %v400 = vadd.f32 %v398, %v399
        %v401 = vadd.f32 %v391, %v393
        %v402 = vrot.slane %v401, 4
        %v403 = vadd.f32 %v401, %v402
        %v404 = vrot.slane %v403, 2
        %v405 = vadd.f32 %v403, %v404
        %v406 = vrot.slane %v405, 1
        %v407 = vadd.f32 %v405, %v406
        %v408 = vmul.f32 %v400, 0.015625
        %v409 = vmul.f32 %v407, 0.015625
        %v410 = vmul.f32 %v305, %v385
        %v411 = vmul.f32 %v308, %v385
        %v412 = vmul.f32 %v311, %v389
        %v413 = vmul.f32 %v314, %v389
        %v414 = vmax.f32 %v410, %v412
        %v415 = vrot.slane %v414, 4
        %v416 = vmax.f32 %v414, %v415
        %v417 = vrot.slane %v416, 2
        %v418 = vmax.f32 %v416, %v417
        %v419 = vrot.slane %v418, 1
        %v420 = vmax.f32 %v418, %v419
        %v421 = vmax.f32 %v411, %v413
        %v422 = vrot.slane %v421, 4
        %v423 = vmax.f32 %v421, %v422
        %v424 = vrot.slane %v423, 2
        %v425 = vmax.f32 %v423, %v424
        %v426 = vrot.slane %v425, 1
        %v427 = vmax.f32 %v425, %v426
        %s428 = sld [smem:[#allocation8 + $0x4]]
        %v429 = vstv %s428
        %v430 = vmul.f32 %v429, %v408
        %v431 = vmul.f32 %v429, %v409
        %s432 = sld [smem:[#allocation8 + $0xd]]
        %v433 = vstv %s432
        %v434 = vmul.f32 %v433, %v420
        %v435 = vmul.f32 %v433, %v427
        %v436 = vadd.f32 %v430, %v434
        %v437 = vadd.f32 %v431, %v435
        %s438 = sld [smem:[#allocation8]]
        %v439 = vstv %s438
        %v440 = vmul.f32 %v439, %v408
        %v441 = vmul.f32 %v439, %v409
        %s442 = sld [smem:[#allocation8 + $0x9]]
        %v443 = vstv %s442
        %v444 = vmul.f32 %v443, %v420
        %v445 = vmul.f32 %v443, %v427
        %v446 = vadd.f32 %v440, %v444
        %v447 = vadd.f32 %v441, %v445
        %448 = vrot.lane.b32.xlu0 %v446, 17
        %v449 = vpop.permute.xlu0 %448
        %450 = vrot.lane.b32.xlu0 %v447, 17
        %v451 = vpop.permute.xlu0 %450
        %v452 = vlaneseq
        %v453 = vand.u32 %v452, 127
        %vm454 = vcmp.lt.s32.totalorder %v453, 17
        %v455 = vsel %vm454, %v449, %v451
        %v456 = vsel %vm454, %v451, %v449
        %v457 = vld [vmem:[#allocation6] ss:$8 sm:$0x3]
        %v459 = vlaneseq
        %v460 = vshrl.u32 %v459, 7
        %v461 = vsub.s32 0, %v460
        %v462 = vrot.slane %v457, %v461
        %v463 = vlaneseq
        %v464 = vshrl.u32 %v463, 7
        %v465 = vsub.s32 1, %v464
        %v466 = vrot.slane %v457, %v465
        %v469 = vmul.f32 %v456, %v462
        %v470 = vmul.f32 %v455, %v466
        %v471 = vadd.f32 %v436, %v469
        %v472 = vadd.f32 %v437, %v470
        %s473 = sld [smem:[#allocation8 + $0x1]]
        %v474 = vstv %s473
        %v475 = vmul.f32 %v474, %v408
        %v476 = vmul.f32 %v474, %v409
        %s477 = sld [smem:[#allocation8 + $0xa]]
        %v478 = vstv %s477
        %v479 = vmul.f32 %v478, %v420
        %v480 = vmul.f32 %v478, %v427
        %v481 = vadd.f32 %v475, %v479
        %v482 = vadd.f32 %v476, %v480
        %483 = vrot.lane.b32.xlu0 %v481, 16
        %v484 = vpop.permute.xlu0 %483
        %485 = vrot.lane.b32.xlu0 %v482, 16
        %v486 = vpop.permute.xlu0 %485
        %vm487 = vcmp.lt.s32.totalorder %v453, 16
        %v488 = vsel %vm487, %v484, %v486
        %v489 = vsel %vm487, %v486, %v484
        %s490 = scalar_lea.vmem [#allocation6], 1
        %v491 = vld [vmem:[%s490] ss:$8 sm:$0x3]
        %v493 = vlaneseq
        %v494 = vshrl.u32 %v493, 7
        %v495 = vsub.s32 0, %v494
        %v496 = vrot.slane %v491, %v495
        %v497 = vlaneseq
        %v498 = vshrl.u32 %v497, 7
        %v499 = vsub.s32 1, %v498
        %v500 = vrot.slane %v491, %v499
        %v503 = vmul.f32 %v489, %v496
        %v504 = vmul.f32 %v488, %v500
        %v505 = vadd.f32 %v471, %v503
        %v506 = vadd.f32 %v472, %v504
        %s507 = sld [smem:[#allocation8 + $0x2]]
        %v508 = vstv %s507
        %v509 = vmul.f32 %v508, %v408
        %v510 = vmul.f32 %v508, %v409
        %s511 = sld [smem:[#allocation8 + $0xb]]
        %v512 = vstv %s511
        %v513 = vmul.f32 %v512, %v420
        %v514 = vmul.f32 %v512, %v427
        %v515 = vadd.f32 %v509, %v513
        %v516 = vadd.f32 %v510, %v514
        %517 = vrot.lane.b32.xlu0 %v515, 15
        %v518 = vpop.permute.xlu0 %517
        %519 = vrot.lane.b32.xlu0 %v516, 15
        %v520 = vpop.permute.xlu0 %519
        %vm521 = vcmp.lt.s32.totalorder %v453, 15
        %v522 = vsel %vm521, %v518, %v520
        %v523 = vsel %vm521, %v520, %v518
        %s524 = scalar_lea.vmem [#allocation6], 2
        %v525 = vld [vmem:[%s524] ss:$8 sm:$0x3]
        %v527 = vlaneseq
        %v528 = vshrl.u32 %v527, 7
        %v529 = vsub.s32 0, %v528
        %v530 = vrot.slane %v525, %v529
        %v531 = vlaneseq
        %v532 = vshrl.u32 %v531, 7
        %v533 = vsub.s32 1, %v532
        %v534 = vrot.slane %v525, %v533
        %v537 = vmul.f32 %v523, %v530
        %v538 = vmul.f32 %v522, %v534
        %v539 = vadd.f32 %v505, %v537
        %v540 = vadd.f32 %v506, %v538
        %s541 = sld [smem:[#allocation8 + $0x3]]
        %v542 = vstv %s541
        %v543 = vmul.f32 %v542, %v408
        %v544 = vmul.f32 %v542, %v409
        %s545 = sld [smem:[#allocation8 + $0xc]]
        %v546 = vstv %s545
        %v547 = vmul.f32 %v546, %v420
        %v548 = vmul.f32 %v546, %v427
        %v549 = vadd.f32 %v543, %v547
        %v550 = vadd.f32 %v544, %v548
        %551 = vrot.lane.b32.xlu0 %v549, 1
        %v552 = vpop.permute.xlu0 %551
        %553 = vrot.lane.b32.xlu0 %v550, 1
        %v554 = vpop.permute.xlu0 %553
        %vm555 = vcmp.lt.s32.totalorder %v453, 1
        %v556 = vsel %vm555, %v552, %v554
        %v557 = vsel %vm555, %v554, %v552
        %s558 = scalar_lea.vmem [#allocation6], 3
        %v559 = vld [vmem:[%s558] ss:$8 sm:$0x3]
        %v561 = vlaneseq
        %v562 = vshrl.u32 %v561, 7
        %v563 = vsub.s32 0, %v562
        %v564 = vrot.slane %v559, %v563
        %v565 = vlaneseq
        %v566 = vshrl.u32 %v565, 7
        %v567 = vsub.s32 1, %v566
        %v568 = vrot.slane %v559, %v567
        %v571 = vmul.f32 %v557, %v564
        %v572 = vmul.f32 %v556, %v568
        %v573 = vadd.f32 %v539, %v571
        %v574 = vadd.f32 %v540, %v572
        %s575 = sld [smem:[#allocation8 + $0x5]]
        %v576 = vstv %s575
        %v577 = vmul.f32 %v576, %v408
        %v578 = vmul.f32 %v576, %v409
        %s579 = sld [smem:[#allocation8 + $0xe]]
        %v580 = vstv %s579
        %v581 = vmul.f32 %v580, %v420
        %v582 = vmul.f32 %v580, %v427
        %v583 = vadd.f32 %v577, %v581
        %v584 = vadd.f32 %v578, %v582
        %585 = vrot.lane.b32.xlu0 %v583, 127
        %v586 = vpop.permute.xlu0 %585
        %587 = vrot.lane.b32.xlu0 %v584, 127
        %v588 = vpop.permute.xlu0 %587
        %vm589 = vcmp.lt.s32.totalorder %v453, 127
        %v590 = vsel %vm589, %v586, %v588
        %v591 = vsel %vm589, %v588, %v586
        %s592 = scalar_lea.vmem [#allocation6], 5
        %v593 = vld [vmem:[%s592] ss:$8 sm:$0x3]
        %v595 = vlaneseq
        %v596 = vshrl.u32 %v595, 7
        %v597 = vsub.s32 0, %v596
        %v598 = vrot.slane %v593, %v597
        %v599 = vlaneseq
        %v600 = vshrl.u32 %v599, 7
        %v601 = vsub.s32 1, %v600
        %v602 = vrot.slane %v593, %v601
        %v605 = vmul.f32 %v590, %v598
        %v606 = vmul.f32 %v591, %v602
        %v607 = vadd.f32 %v573, %v605
        %v608 = vadd.f32 %v574, %v606
        %s609 = sld [smem:[#allocation8 + $0x6]]
        %v610 = vstv %s609
        %v611 = vmul.f32 %v610, %v408
        %v612 = vmul.f32 %v610, %v409
        %s613 = sld [smem:[#allocation8 + $0xf]]
        %v614 = vstv %s613
        %v615 = vmul.f32 %v614, %v420
        %v616 = vmul.f32 %v614, %v427
        %v617 = vadd.f32 %v611, %v615
        %v618 = vadd.f32 %v612, %v616
        %619 = vrot.lane.b32.xlu0 %v617, 113
        %v620 = vpop.permute.xlu0 %619
        %621 = vrot.lane.b32.xlu0 %v618, 113
        %v622 = vpop.permute.xlu0 %621
        %vm623 = vcmp.lt.s32.totalorder %v453, 113
        %v624 = vsel %vm623, %v620, %v622
        %v625 = vsel %vm623, %v622, %v620
        %s626 = scalar_lea.vmem [#allocation6], 6
        %v627 = vld [vmem:[%s626] ss:$8 sm:$0x3]
        %v629 = vlaneseq
        %v630 = vshrl.u32 %v629, 7
        %v631 = vsub.s32 0, %v630
        %v632 = vrot.slane %v627, %v631
        %v633 = vlaneseq
        %v634 = vshrl.u32 %v633, 7
        %v635 = vsub.s32 1, %v634
        %v636 = vrot.slane %v627, %v635
        %v639 = vmul.f32 %v624, %v632
        %v640 = vmul.f32 %v625, %v636
        %v641 = vadd.f32 %v607, %v639
        %v642 = vadd.f32 %v608, %v640
        %s643 = sld [smem:[#allocation8 + $0x7]]
        %v644 = vstv %s643
        %v645 = vmul.f32 %v644, %v408
        %v646 = vmul.f32 %v644, %v409
        %s647 = sld [smem:[#allocation8 + $0x10]]
        %v648 = vstv %s647
        %v649 = vmul.f32 %v648, %v420
        %v650 = vmul.f32 %v648, %v427
        %v651 = vadd.f32 %v645, %v649
        %v652 = vadd.f32 %v646, %v650
        %653 = vrot.lane.b32.xlu0 %v651, 112
        %v654 = vpop.permute.xlu0 %653
        %655 = vrot.lane.b32.xlu0 %v652, 112
        %v656 = vpop.permute.xlu0 %655
        %vm657 = vcmp.lt.s32.totalorder %v453, 112
        %v658 = vsel %vm657, %v654, %v656
        %v659 = vsel %vm657, %v656, %v654
        %s660 = scalar_lea.vmem [#allocation6], 7
        %v661 = vld [vmem:[%s660] ss:$8 sm:$0x3]
        %v663 = vlaneseq
        %v664 = vshrl.u32 %v663, 7
        %v665 = vsub.s32 0, %v664
        %v666 = vrot.slane %v661, %v665
        %v667 = vlaneseq
        %v668 = vshrl.u32 %v667, 7
        %v669 = vsub.s32 1, %v668
        %v670 = vrot.slane %v661, %v669
        %v673 = vmul.f32 %v658, %v666
        %v674 = vmul.f32 %v659, %v670
        %v675 = vadd.f32 %v641, %v673
        %v676 = vadd.f32 %v642, %v674
        %s677 = sld [smem:[#allocation8 + $0x8]]
        %v678 = vstv %s677
        %v679 = vmul.f32 %v678, %v408
        %v680 = vmul.f32 %v678, %v409
        %s681 = sld [smem:[#allocation8 + $0x11]]
        %v682 = vstv %s681
        %v683 = vmul.f32 %v682, %v420
        %v684 = vmul.f32 %v682, %v427
        %v685 = vadd.f32 %v679, %v683
        %v686 = vadd.f32 %v680, %v684
        %687 = vrot.lane.b32.xlu0 %v685, 111
        %v688 = vpop.permute.xlu0 %687
        %689 = vrot.lane.b32.xlu0 %v686, 111
        %v690 = vpop.permute.xlu0 %689
        %vm691 = vcmp.lt.s32.totalorder %v453, 111
        %v692 = vsel %vm691, %v688, %v690
        %v693 = vsel %vm691, %v690, %v688
        %s694 = scalar_lea.vmem [#allocation6], 16
        %v695 = vld [vmem:[%s694] ss:$8 sm:$0x3]
        %v697 = vlaneseq
        %v698 = vshrl.u32 %v697, 7
        %v699 = vsub.s32 0, %v698
        %v700 = vrot.slane %v695, %v699
        %v701 = vlaneseq
        %v702 = vshrl.u32 %v701, 7
        %v703 = vsub.s32 1, %v702
        %v704 = vrot.slane %v695, %v703
        %v707 = vmul.f32 %v692, %v700
        %v708 = vmul.f32 %v693, %v704
        %v709 = vadd.f32 %v675, %v707
        %v710 = vadd.f32 %v676, %v708
        %v711 = vsub.f32 0.0, %v709
        %v712 = vsub.f32 0.0, %v710
        %v713 = vmul.f32 %v711, 1.442695
        %v714 = vpow.pop %v713
        %v715 = vmul.f32 %v712, 1.442695
        %v716 = vpow.pop %v715
        %v717 = vadd.f32 %v714, 1.0
        %v718 = vadd.f32 %v716, 1.0
        %v719 = vrcp.pop %v717
        %v720 = vrcp.pop %v718
        %v721 = vlaneseq
        %v722 = vshrl.u32 %v721, 7
        %v723 = vsub.s32 0, %v722
        %v724 = vrot.slane %v719, %v723
        %v725 = vlaneseq
        %v726 = vshrl.u32 %v725, 7
        %v727 = vsub.s32 0, %v726
        %v728 = vrot.slane %v720, %v727
        %v729 = vmul.f32 %v385, %v724
        %v730 = vmul.f32 %v385, %v728
        %v731 = vmul.f32 %v389, %v724
        %v732 = vmul.f32 %v389, %v728
        %v733 = vmul.f32 %v272, %v729
        %v734 = vmul.f32 %v273, %v730
        %v735 = vmul.f32 %v274, %v731
        %v736 = vmul.f32 %v275, %v732
        %v737 = vmul.f32 %v276, %v729
        %v738 = vmul.f32 %v277, %v730
        %v739 = vmul.f32 %v278, %v731
        %v740 = vmul.f32 %v279, %v732
        %v741 = vmul.f32 %v280, %v729
        %v742 = vmul.f32 %v281, %v730
        %v743 = vmul.f32 %v282, %v731
        %v744 = vmul.f32 %v283, %v732
        %v745 = vmul.f32 %v284, %v729
        %v746 = vmul.f32 %v285, %v730
        %v747 = vmul.f32 %v286, %v731
        %v748 = vmul.f32 %v287, %v732
        %v749 = vmax.f32 %v733, 0.0
        %v750 = vmax.f32 %v734, 0.0
        %v751 = vmax.f32 %v735, 0.0
        %v752 = vmax.f32 %v736, 0.0
        %v753 = vmax.f32 %v737, 0.0
        %v754 = vmax.f32 %v738, 0.0
        %v755 = vmax.f32 %v739, 0.0
        %v756 = vmax.f32 %v740, 0.0
        %v757 = vmax.f32 %v741, 0.0
        %v758 = vmax.f32 %v742, 0.0
        %v759 = vmax.f32 %v743, 0.0
        %v760 = vmax.f32 %v744, 0.0
        %v761 = vmax.f32 %v745, 0.0
        %v762 = vmax.f32 %v746, 0.0
        %v763 = vmax.f32 %v747, 0.0
        %v764 = vmax.f32 %v748, 0.0
        %765 = vst [vmem:[%s271] sm:$0xff] %v749
        %766 = vst [vmem:[%s271 + $0x8] sm:$0xff] %v750
        %767 = vst [vmem:[%s271 + $0x10] sm:$0xff] %v751
        %768 = vst [vmem:[%s271 + $0x18] sm:$0xff] %v752
        %769 = vst [vmem:[%s271 + $0x20] sm:$0xff] %v753
        %770 = vst [vmem:[%s271 + $0x28] sm:$0xff] %v754
        %771 = vst [vmem:[%s271 + $0x30] sm:$0xff] %v755
        %772 = vst [vmem:[%s271 + $0x38] sm:$0xff] %v756
        %773 = vst [vmem:[%s271 + $0x40] sm:$0xff] %v757
        %774 = vst [vmem:[%s271 + $0x48] sm:$0xff] %v758
        %775 = vst [vmem:[%s271 + $0x50] sm:$0xff] %v759
        %776 = vst [vmem:[%s271 + $0x58] sm:$0xff] %v760
        %777 = vst [vmem:[%s271 + $0x60] sm:$0xff] %v761
        %778 = vst [vmem:[%s271 + $0x68] sm:$0xff] %v762
        %779 = vst [vmem:[%s271 + $0x70] sm:$0xff] %v763
        %780 = vst [vmem:[%s271 + $0x78] sm:$0xff] %v764
        %s781 = sand.u32 %s142, 1
        %s782 = scalar_lea.sflag [#allocation4], %s781
        %s783 = sand.u32 %s142, 1
        %s784 = smul.addr %s783, 128
        %s785 = scalar_lea.vmem [#allocation9], %s784
        // Predicated region
        $region53: #{tpu_custom_call.1} parent=39 // pred_check
          %p786 = pneg %p152
        $region54: #{tpu_custom_call.1} parent=39 // pred_check_branch
          %788 = sbr.rel (%p786) target = $region56
        $region55: #{tpu_custom_call.1} parent=39 // pred_region
          %s790 = ssub.s32 2048, 2048
          %791 = vsyncadd %s782, %s790
          %s792 = smul.addr %s24, 16
          %s793 = smul.addr %s792, 128
          %s794 = scalar_lea.hbm %s5, %s793
          %s795 = sshll.u32 %s785, 4
          %s796 = int_to_ptr.vmem [resolvable:$true] %s795
          %801 = dma.vmem_to_hbm [thread:$0]  %s796, 2048, %s794, %s782, 256, 256, 16
        $region56: #{tpu_custom_call.1} parent=39 // pred_fallthru
          _
      $region40: #{tpu_custom_call.1} parent=5 // pred_fallthru
        _
      %p802 = scmp.le.s32.totalorder 2, %s19
      // Predicated region
      $region57: #{tpu_custom_call.1} parent=5 // pred_check
        %p803 = pneg %p802
      $region58: #{tpu_custom_call.1} parent=5 // pred_check_branch
        %805 = sbr.rel (%p803) target = $region60
      $region59: #{tpu_custom_call.1} parent=5 // pred_region
        %s806 = ssub.s32 %s19, 2
        // Predicated region
        $region61: #{tpu_custom_call.1} parent=59 // pred_check
          %p807 = pneg %p158
        $region62: #{tpu_custom_call.1} parent=59 // pred_check_branch
          %809 = sbr.rel (%p807) target = $region64
        $region63: #{tpu_custom_call.1} parent=59 // pred_region
          %s810 = sand.u32 %s143, 1
          %s811 = scalar_lea.sflag [#allocation4], %s810
          %s812 = sand.u32 %s143, 1
          %s813 = smul.addr %s812, 128
          %s814 = scalar_lea.vmem [#allocation9], %s813
          %815 = dma.done %s811, 2048
        $region64: #{tpu_custom_call.1} parent=59 // pred_fallthru
          _
      $region60: #{tpu_custom_call.1} parent=5 // pred_fallthru
        _
    $region6: #{tpu_custom_call.1} parent=1 // loop_footer
      %s23 = sadd.s32 1, %s19
    $region7: #{tpu_custom_call.1} parent=1 // loop_footer_branch
      %18 = sbr.rel target = $region3
    $region8: #{tpu_custom_call.1} parent=1 // loop_exit
      _
    %816 = vsyncpa [#allocation3], 1
    %s817 = scalar_lea.sflag [#allocation3], 1
    %818 = vsyncpa %s817, 1
    %819 = vsyncpa [#allocation7], 1
    %820 = vsyncpa [#allocation4], 1
    %s821 = scalar_lea.sflag [#allocation4], 1
    %822 = vsyncpa %s821, 1
    %823 = vsyncpa [#allocation5], 1
    %s824 = scalar_lea.sflag [#allocation5], 1
    %825 = vsyncpa %s824, 1

</llo_original>
